<compile_context>
chip_gen: v5e
topology: v5e:2x2
jax: 0.10.0
libtpu: 0.0.40
codegen_flags: <defaults>
</compile_context>

<pallas_src>
import jax
import jax.numpy as jnp
from jax import lax
from jax.experimental import pallas as pl
from jax.experimental.pallas import tpu as pltpu


# ------------------------- small, module-consistent shapes ------------------
B = 2            # batch
L = 16           # sequence length
HID_DIM = 128    # hid_dim  (lane-dense: multiple of 128)
PF_DIM = 256     # pf_dim   (lane-dense: multiple of 128)
N = B * L        # folded row axis (multiple of 8 sublanes)


def pff_kernel(x_ref, w1_ref, b1_ref, w2_ref, b2_ref, out_ref):
    """Whole batch in one invocation: relu(x @ W1 + b1) @ W2 + b2."""
    x = x_ref[...]                                          # [N, HID_DIM]

    # fc_1 (Conv1d(hid, pf, 1)) + ReLU, single MXU dot, f32 accumulate.
    h = jnp.dot(x, w1_ref[...], preferred_element_type=jnp.float32)
    h = jnp.maximum(h + b1_ref[...], 0.0)                   # [N, PF_DIM]

    # fc_2 (Conv1d(pf, hid, 1)), single MXU dot.
    y = jnp.dot(h, w2_ref[...], preferred_element_type=jnp.float32)
    y = y + b2_ref[...]                                     # [N, HID_DIM]

    out_ref[...] = y.astype(out_ref.dtype)                  # lane-dense store


def positionwise_feedforward(x, w1, b1, w2, b2):
    """x: [B, L, HID_DIM] f32 -> [B, L, HID_DIM] f32.

    w1: [HID_DIM, PF_DIM]  (== torch fc_1.weight[:, :, 0].T)
    b1: [1, PF_DIM]
    w2: [PF_DIM, HID_DIM]  (== torch fc_2.weight[:, :, 0].T)
    b2: [1, HID_DIM]
    """
    Bb, Ll, H = x.shape
    n = Bb * Ll
    x2 = x.reshape(n, H)                                    # fold batch into rows

    out = pl.pallas_call(
        pff_kernel,
        out_shape=jax.ShapeDtypeStruct((n, H), jnp.float32),
        grid_spec=pltpu.PrefetchScalarGridSpec(
            num_scalar_prefetch=0,
            grid=(1,),                                      # single step: whole batch
            in_specs=[
                pl.BlockSpec((n, H), lambda i: (0, 0)),         # x (folded)
                pl.BlockSpec((H, PF_DIM), lambda i: (0, 0)),    # w1
                pl.BlockSpec((1, PF_DIM), lambda i: (0, 0)),    # b1
                pl.BlockSpec((PF_DIM, H), lambda i: (0, 0)),    # w2
                pl.BlockSpec((1, H), lambda i: (0, 0)),         # b2
            ],
            out_specs=pl.BlockSpec((n, H), lambda i: (0, 0)),
        ),
        compiler_params=pltpu.CompilerParams(
            dimension_semantics=("arbitrary",)),
    )(x2, w1, b1, w2, b2)

    return out.reshape(Bb, Ll, H)


def reference_forward(x, w1, b1, w2, b2):
    """Pure-JAX reference reproducing the PyTorch forward (eval mode)."""
    h = jnp.einsum('blh,hp->blp', x, w1,
                   precision=lax.Precision.HIGHEST) + b1
    h = jnp.maximum(h, 0.0)
    y = jnp.einsum('blp,ph->blh', h, w2,
                   precision=lax.Precision.HIGHEST) + b2
    return y


if __name__ == "__main__":
    key = jax.random.PRNGKey(0)
    ks = jax.random.split(key, 5)

    # Input: [B, L, hid_dim] (channel-last; the module's permutes are folded in).
    x = jax.random.normal(ks[0], (B, L, HID_DIM), jnp.float32)

    # Parameters (torch Conv1d kxk=1 weights, stored transposed as [in, out]).
    w1 = jax.random.normal(ks[1], (HID_DIM, PF_DIM), jnp.float32) * 0.1
    b1 = jax.random.normal(ks[2], (1, PF_DIM), jnp.float32) * 0.1
    w2 = jax.random.normal(ks[3], (PF_DIM, HID_DIM), jnp.float32) * 0.1
    b2 = jax.random.normal(ks[4], (1, HID_DIM), jnp.float32) * 0.1

    out = positionwise_feedforward(x, w1, b1, w2, b2)
    out = jax.block_until_ready(out)

    ref = reference_forward(x, w1, b1, w2, b2)
    assert out.shape == (B, L, HID_DIM)
    assert jnp.allclose(out, ref, atol=2e-3, rtol=2e-3), "mismatch vs JAX reference"

    print("KERNEL_OK")
</pallas_src>

<mosaic_0001>
module attributes {stable_mosaic.version = 11 : i64} {
  func.func @pff_kernel(%arg0: i32, %arg1: memref<32x128xf32, #tpu.memory_space<vmem>>, %arg2: memref<128x256xf32, #tpu.memory_space<vmem>>, %arg3: memref<1x256xf32, #tpu.memory_space<vmem>>, %arg4: memref<256x128xf32, #tpu.memory_space<vmem>>, %arg5: memref<1x128xf32, #tpu.memory_space<vmem>>, %arg6: memref<32x128xf32, #tpu.memory_space<vmem>>) attributes {dimension_semantics = [#tpu.dimension_semantics<arbitrary>], iteration_bounds = array<i64: 1>, scalar_prefetch = 0 : i64, scratch_operands = 0 : i64, tpu.core_type = #tpu.core_type<tc>, window_params = [{pipeline_mode = #tpu.pipeline_mode<synchronous>, transform_indices = @transform_0, window_bounds = array<i64: 32, 128>}, {pipeline_mode = #tpu.pipeline_mode<synchronous>, transform_indices = @transform_1, window_bounds = array<i64: 128, 256>}, {pipeline_mode = #tpu.pipeline_mode<synchronous>, transform_indices = @transform_2, window_bounds = array<i64: 1, 256>}, {pipeline_mode = #tpu.pipeline_mode<synchronous>, transform_indices = @transform_3, window_bounds = array<i64: 256, 128>}, {pipeline_mode = #tpu.pipeline_mode<synchronous>, transform_indices = @transform_4, window_bounds = array<i64: 1, 128>}, {pipeline_mode = #tpu.pipeline_mode<synchronous>, transform_indices = @transform_5, window_bounds = array<i64: 32, 128>}]} {
    %c0 = arith.constant 0 : index
    %c0_0 = arith.constant 0 : index
    %0 = vector.load %arg1[%c0, %c0_0] : memref<32x128xf32, #tpu.memory_space<vmem>>, vector<32x128xf32>
    %c0_1 = arith.constant 0 : index
    %c0_2 = arith.constant 0 : index
    %1 = vector.load %arg2[%c0_1, %c0_2] : memref<128x256xf32, #tpu.memory_space<vmem>>, vector<128x256xf32>
    %cst = arith.constant dense<0.000000e+00> : vector<32x256xf32>
    %2 = tpu.matmul %0, %1, %cst {dimension_numbers = #tpu.dot_dimension_numbers<[1], [0], [0], [1], [0, 0, 1, 1], [], []>} : vector<32x128xf32>, vector<128x256xf32>, vector<32x256xf32> -> vector<32x256xf32>
    %c0_3 = arith.constant 0 : index
    %c0_4 = arith.constant 0 : index
    %3 = vector.load %arg3[%c0_3, %c0_4] : memref<1x256xf32, #tpu.memory_space<vmem>>, vector<1x256xf32>
    %4 = vector.broadcast %3 : vector<1x256xf32> to vector<32x256xf32>
    %5 = arith.addf %2, %4 : vector<32x256xf32>
    %cst_5 = arith.constant 0.000000e+00 : f32
    %6 = vector.broadcast %cst_5 : f32 to vector<32x256xf32>
    %7 = arith.maximumf %5, %6 : vector<32x256xf32>
    %c0_6 = arith.constant 0 : index
    %c0_7 = arith.constant 0 : index
    %8 = vector.load %arg4[%c0_6, %c0_7] : memref<256x128xf32, #tpu.memory_space<vmem>>, vector<256x128xf32>
    %cst_8 = arith.constant dense<0.000000e+00> : vector<32x128xf32>
    %9 = tpu.matmul %7, %8, %cst_8 {dimension_numbers = #tpu.dot_dimension_numbers<[1], [0], [0], [1], [0, 0, 1, 1], [], []>} : vector<32x256xf32>, vector<256x128xf32>, vector<32x128xf32> -> vector<32x128xf32>
    %c0_9 = arith.constant 0 : index
    %c0_10 = arith.constant 0 : index
    %10 = vector.load %arg5[%c0_9, %c0_10] : memref<1x128xf32, #tpu.memory_space<vmem>>, vector<1x128xf32>
    %11 = vector.broadcast %10 : vector<1x128xf32> to vector<32x128xf32>
    %12 = arith.addf %9, %11 : vector<32x128xf32>
    %c0_11 = arith.constant 0 : index
    %c0_12 = arith.constant 0 : index
    %13 = vector.load %arg6[%c0_11, %c0_12] : memref<32x128xf32, #tpu.memory_space<vmem>>, vector<32x128xf32>
    tpu.vector_store %arg6[%c0_11, %c0_12], %12 {strides = array<i32>} : memref<32x128xf32, #tpu.memory_space<vmem>>, vector<32x128xf32>,
    return
  }
  func.func @transform_0(%arg0: i32) -> (i32, i32) {
    %c0_i32 = arith.constant 0 : i32
    %c0_i32_0 = arith.constant 0 : i32
    %c0_i32_1 = arith.constant 0 : i32
    return %c0_i32, %c0_i32_0 : i32, i32
  }
  func.func @transform_1(%arg0: i32) -> (i32, i32) {
    %c0_i32 = arith.constant 0 : i32
    %c0_i32_0 = arith.constant 0 : i32
    %c0_i32_1 = arith.constant 0 : i32
    return %c0_i32, %c0_i32_0 : i32, i32
  }
  func.func @transform_2(%arg0: i32) -> (i32, i32) {
    %c0_i32 = arith.constant 0 : i32
    %c0_i32_0 = arith.constant 0 : i32
    %c0_i32_1 = arith.constant 0 : i32
    return %c0_i32, %c0_i32_0 : i32, i32
  }
  func.func @transform_3(%arg0: i32) -> (i32, i32) {
    %c0_i32 = arith.constant 0 : i32
    %c0_i32_0 = arith.constant 0 : i32
    %c0_i32_1 = arith.constant 0 : i32
    return %c0_i32, %c0_i32_0 : i32, i32
  }
  func.func @transform_4(%arg0: i32) -> (i32, i32) {
    %c0_i32 = arith.constant 0 : i32
    %c0_i32_0 = arith.constant 0 : i32
    %c0_i32_1 = arith.constant 0 : i32
    return %c0_i32, %c0_i32_0 : i32, i32
  }
  func.func @transform_5(%arg0: i32) -> (i32, i32) {
    %c0_i32 = arith.constant 0 : i32
    %c0_i32_0 = arith.constant 0 : i32
    %c0_i32_1 = arith.constant 0 : i32
    return %c0_i32, %c0_i32_0 : i32, i32
  }
}

</mosaic_0001>

<llo_original>
// kernel: tpu_custom_call.1
$region0: #{tpu_custom_call.1}
  #allocation0 [shape = 'u32[]', space=smem, size = 0x4, offset = 0x4, fixed_abs, tag = 'smem constant byte address 0x4 - core index']
  #allocation1 [shape = 'u32[72,128]{1,0:T(1,128)}', space=vmem, size = 0x9000, scoped, tag = 'internal scratch']
  %s0 = inlined_call_operand.hbm [shape: f32[32,128], index: 0, kind: input, shape index: {}]
  %s1 = inlined_call_operand.hbm [shape: f32[128,256], index: 1, kind: input, shape index: {}]
  %s2 = inlined_call_operand.hbm [shape: f32[1,256], index: 2, kind: input, shape index: {}]
  %s3 = inlined_call_operand.hbm [shape: f32[256,128], index: 3, kind: input, shape index: {}]
  %s4 = inlined_call_operand.vmem [shape: f32[1,128], index: 4, kind: input, shape index: {}]
  %s5 = inlined_call_operand.hbm [shape: f32[32,128], index: 5, kind: output, shape index: {}]
  %s6 = sld [smem:[#allocation0]]
  $region46: #{tpu_custom_call.1} parent=0
    _
  %s8 = ssub.s32 1, %s6
  %s9 = scalar_select 0, %s8, %s6
  $region1: #{tpu_custom_call.1} parent=0
    #allocation2 [shape = 'u8[16384]{0}', space=vmem, size = 0x4000, scoped, tag = 'input window, operand 0, single buffered']
    #allocation3 [shape = 's32[1]{0}', space=sflag, size = 0x4, scoped, tag = 'scoped memory for tpu_custom_call.1']
    #allocation4 [shape = 's32[1]{0}', space=sflag, size = 0x4, scoped, tag = 'scoped memory for tpu_custom_call.1']
    #allocation5 [shape = 'u8[131072]{0}', space=vmem, size = 0x20000, scoped, tag = 'input window, operand 1, single buffered']
    #allocation6 [shape = 's32[1]{0}', space=sflag, size = 0x4, scoped, tag = 'scoped memory for tpu_custom_call.1']
    #allocation7 [shape = 'u8[1024]{0}', space=vmem, size = 0x400, scoped, tag = 'input window, operand 2, single buffered']
    #allocation8 [shape = 'u8[131072]{0}', space=vmem, size = 0x20000, scoped, tag = 'input window, operand 3, single buffered']
    #allocation9 [shape = 's32[1]{0}', space=sflag, size = 0x4, scoped, tag = 'scoped memory for tpu_custom_call.1']
    #allocation10 [shape = 'u8[16384]{0}', space=vmem, size = 0x4000, scoped, tag = 'output window, operand 0, single buffered']
    %10 = vsyncpa [#allocation3], 0
    %11 = vsyncpa [#allocation6], 0
    %12 = vsyncpa [#allocation9], 0
    %13 = vsyncpa [#allocation4], 0
    // Predicated region
    $region2: #{tpu_custom_call.1} parent=1 // pred_check
      _
    $region3: #{tpu_custom_call.1} parent=1 // pred_check_branch
      %15 = sbr.rel (0) target = $region5
    $region4: #{tpu_custom_call.1} parent=1 // pred_region
      %17 = vsyncadd [#allocation3], 0
      %s18 = sshll.u32 %s0, 4
      %s19 = int_to_ptr.hbm [resolvable:$true] %s18
      %s20 = sshll.u32 [#allocation2], 4
      %s21 = int_to_ptr.vmem [resolvable:$true] %s20
      %26 = dma.hbm_to_vmem [thread:$0]  %s19, 512, %s21, [#allocation3], 128, 128, 8
    $region5: #{tpu_custom_call.1} parent=1 // pred_fallthru
      _
    // Predicated region
    $region6: #{tpu_custom_call.1} parent=1 // pred_check
      _
    $region7: #{tpu_custom_call.1} parent=1 // pred_check_branch
      %28 = sbr.rel (0) target = $region9
    $region8: #{tpu_custom_call.1} parent=1 // pred_region
      %30 = vsyncadd [#allocation6], 0
      %s31 = sshll.u32 %s1, 4
      %s32 = int_to_ptr.hbm [resolvable:$true] %s31
      %s33 = sshll.u32 [#allocation5], 4
      %s34 = int_to_ptr.vmem [resolvable:$true] %s33
      %39 = dma.hbm_to_vmem [thread:$0]  %s32, 4096, %s34, [#allocation6], 256, 256, 16
    $region9: #{tpu_custom_call.1} parent=1 // pred_fallthru
      _
    // Predicated region
    $region10: #{tpu_custom_call.1} parent=1 // pred_check
      _
    $region11: #{tpu_custom_call.1} parent=1 // pred_check_branch
      %41 = sbr.rel (0) target = $region13
    $region12: #{tpu_custom_call.1} parent=1 // pred_region
      %43 = vsyncadd [#allocation6], 0
      %s45 = sshll.u32 %s2, 4
      %s46 = int_to_ptr.hbm [resolvable:$true] %s45
      %s47 = sshll.u32 [#allocation7], 4
      %s48 = int_to_ptr.vmem [resolvable:$true] %s47
      %50 = dma.hbm_to_vmem [thread:$0]  %s46, 32, %s48, [#allocation6]
    $region13: #{tpu_custom_call.1} parent=1 // pred_fallthru
      _
    // Predicated region
    $region14: #{tpu_custom_call.1} parent=1 // pred_check
      _
    $region15: #{tpu_custom_call.1} parent=1 // pred_check_branch
      %52 = sbr.rel (0) target = $region17
    $region16: #{tpu_custom_call.1} parent=1 // pred_region
      %54 = vsyncadd [#allocation9], 0
      %s55 = sshll.u32 %s3, 4
      %s56 = int_to_ptr.hbm [resolvable:$true] %s55
      %s57 = sshll.u32 [#allocation8], 4
      %s58 = int_to_ptr.vmem [resolvable:$true] %s57
      %63 = dma.hbm_to_vmem [thread:$0]  %s56, 4096, %s58, [#allocation9], 128, 128, 8
    $region17: #{tpu_custom_call.1} parent=1 // pred_fallthru
      _
    // Predicated region
    $region18: #{tpu_custom_call.1} parent=1 // pred_check
      _
    $region19: #{tpu_custom_call.1} parent=1 // pred_check_branch
      %65 = sbr.rel (0) target = $region21
    $region20: #{tpu_custom_call.1} parent=1 // pred_region
      _
    $region21: #{tpu_custom_call.1} parent=1 // pred_fallthru
      _
    // Predicated region
    $region22: #{tpu_custom_call.1} parent=1 // pred_check
      _
    $region23: #{tpu_custom_call.1} parent=1 // pred_check_branch
      %67 = sbr.rel (0) target = $region25
    $region24: #{tpu_custom_call.1} parent=1 // pred_region
      %69 = dma.done [#allocation3], 512
    $region25: #{tpu_custom_call.1} parent=1 // pred_fallthru
      _
    // Predicated region
    $region26: #{tpu_custom_call.1} parent=1 // pred_check
      _
    $region27: #{tpu_custom_call.1} parent=1 // pred_check_branch
      %71 = sbr.rel (0) target = $region29
    $region28: #{tpu_custom_call.1} parent=1 // pred_region
      %73 = dma.done [#allocation6], 4096
    $region29: #{tpu_custom_call.1} parent=1 // pred_fallthru
      _
    // Predicated region
    $region30: #{tpu_custom_call.1} parent=1 // pred_check
      _
    $region31: #{tpu_custom_call.1} parent=1 // pred_check_branch
      %75 = sbr.rel (0) target = $region33
    $region32: #{tpu_custom_call.1} parent=1 // pred_region
      %77 = dma.done [#allocation6], 32
    $region33: #{tpu_custom_call.1} parent=1 // pred_fallthru
      _
    // Predicated region
    $region34: #{tpu_custom_call.1} parent=1 // pred_check
      _
    $region35: #{tpu_custom_call.1} parent=1 // pred_check_branch
      %79 = sbr.rel (0) target = $region37
    $region36: #{tpu_custom_call.1} parent=1 // pred_region
      %81 = dma.done [#allocation9], 4096
    $region37: #{tpu_custom_call.1} parent=1 // pred_fallthru
      _
    %v82 = vld [vmem:[#allocation2] sm:$0xff]
    %v83 = vld [vmem:[#allocation2 + $0x8] sm:$0xff]
    %v84 = vld [vmem:[#allocation2 + $0x10] sm:$0xff]
    %v85 = vld [vmem:[#allocation2 + $0x18] sm:$0xff]
    %v86 = vld [vmem:[#allocation5] sm:$0xff]
    %v87 = vld [vmem:[#allocation5 + $0x8] sm:$0xff]
    %v88 = vld [vmem:[#allocation5 + $0x10] sm:$0xff]
    %v89 = vld [vmem:[#allocation5 + $0x18] sm:$0xff]
    %v90 = vld [vmem:[#allocation5 + $0x20] sm:$0xff]
    %v91 = vld [vmem:[#allocation5 + $0x28] sm:$0xff]
    %v92 = vld [vmem:[#allocation5 + $0x30] sm:$0xff]
    %v93 = vld [vmem:[#allocation5 + $0x38] sm:$0xff]
    %v94 = vld [vmem:[#allocation5 + $0x40] sm:$0xff]
    %v95 = vld [vmem:[#allocation5 + $0x48] sm:$0xff]
    %v96 = vld [vmem:[#allocation5 + $0x50] sm:$0xff]
    %v97 = vld [vmem:[#allocation5 + $0x58] sm:$0xff]
    %v98 = vld [vmem:[#allocation5 + $0x60] sm:$0xff]
    %v99 = vld [vmem:[#allocation5 + $0x68] sm:$0xff]
    %v100 = vld [vmem:[#allocation5 + $0x70] sm:$0xff]
    %v101 = vld [vmem:[#allocation5 + $0x78] sm:$0xff]
    %v102 = vld [vmem:[#allocation5 + $0x80] sm:$0xff]
    %v103 = vld [vmem:[#allocation5 + $0x88] sm:$0xff]
    %v104 = vld [vmem:[#allocation5 + $0x90] sm:$0xff]
    %v105 = vld [vmem:[#allocation5 + $0x98] sm:$0xff]
    %v106 = vld [vmem:[#allocation5 + $0xa0] sm:$0xff]
    %v107 = vld [vmem:[#allocation5 + $0xa8] sm:$0xff]
    %v108 = vld [vmem:[#allocation5 + $0xb0] sm:$0xff]
    %v109 = vld [vmem:[#allocation5 + $0xb8] sm:$0xff]
    %v110 = vld [vmem:[#allocation5 + $0xc0] sm:$0xff]
    %v111 = vld [vmem:[#allocation5 + $0xc8] sm:$0xff]
    %v112 = vld [vmem:[#allocation5 + $0xd0] sm:$0xff]
    %v113 = vld [vmem:[#allocation5 + $0xd8] sm:$0xff]
    %v114 = vld [vmem:[#allocation5 + $0xe0] sm:$0xff]
    %v115 = vld [vmem:[#allocation5 + $0xe8] sm:$0xff]
    %v116 = vld [vmem:[#allocation5 + $0xf0] sm:$0xff]
    %v117 = vld [vmem:[#allocation5 + $0xf8] sm:$0xff]
    %v118 = vld [vmem:[#allocation7] sm:$0x3]
    %v120 = vperm.slane %v118, 0
    %v121 = vperm.slane %v118, 1
    %124 = vmatpush.msra.mxu0 %v116
    %125 = vmatpush.msra.mxu0 %v114
    %126 = vmatpush.msra.mxu0 %v112
    %127 = vmatpush.msra.mxu0 %v110
    %128 = vmatpush.msra.mxu0 %v108
    %129 = vmatpush.msra.mxu0 %v106
    %130 = vmatpush.msra.mxu0 %v104
    %131 = vmatpush.msra.mxu0 %v102
    %132 = vmatpush.msra.mxu0 %v100
    %133 = vmatpush.msra.mxu0 %v98
    %134 = vmatpush.msra.mxu0 %v96
    %135 = vmatpush.msra.mxu0 %v94
    %136 = vmatpush.msra.mxu0 %v92
    %137 = vmatpush.msra.mxu0 %v90
    %138 = vmatpush.msra.mxu0 %v88
    %139 = vmatpush.msra.mxu0 %v86
    %140 = vmatmul.f32.gmra.mxu0 %v82
    %v141 = vpop.f32.mrf.mxu0
    %v142 = vadd.f32 %v120, %v141
    %143 = vmatmul.f32.gmra.mxu0 %v83
    %v144 = vpop.f32.mrf.mxu0
    %v145 = vadd.f32 %v120, %v144
    %146 = vmatmul.f32.gmra.mxu0 %v84
    %v147 = vpop.f32.mrf.mxu0
    %v148 = vadd.f32 %v120, %v147
    %149 = vmatmul.f32.gmra.mxu0 %v85
    %v150 = vpop.f32.mrf.mxu0
    %v151 = vadd.f32 %v120, %v150
    %152 = vdwg.mxu0
    %153 = vmatpush.msra.mxu0 %v117
    %154 = vmatpush.msra.mxu0 %v115
    %155 = vmatpush.msra.mxu0 %v113
    %156 = vmatpush.msra.mxu0 %v111
    %157 = vmatpush.msra.mxu0 %v109
    %158 = vmatpush.msra.mxu0 %v107
    %159 = vmatpush.msra.mxu0 %v105
    %160 = vmatpush.msra.mxu0 %v103
    %161 = vmatpush.msra.mxu0 %v101
    %162 = vmatpush.msra.mxu0 %v99
    %163 = vmatpush.msra.mxu0 %v97
    %164 = vmatpush.msra.mxu0 %v95
    %165 = vmatpush.msra.mxu0 %v93
    %166 = vmatpush.msra.mxu0 %v91
    %167 = vmatpush.msra.mxu0 %v89
    %168 = vmatpush.msra.mxu0 %v87
    %169 = vmatmul.f32.gmra.mxu0 %v82
    %v170 = vpop.f32.mrf.mxu0
    %v171 = vadd.f32 %v121, %v170
    %172 = vmatmul.f32.gmra.mxu0 %v83
    %v173 = vpop.f32.mrf.mxu0
    %v174 = vadd.f32 %v121, %v173
    %175 = vmatmul.f32.gmra.mxu0 %v84
    %v176 = vpop.f32.mrf.mxu0
    %v177 = vadd.f32 %v121, %v176
    %178 = vmatmul.f32.gmra.mxu0 %v85
    %v179 = vpop.f32.mrf.mxu0
    %v180 = vadd.f32 %v121, %v179
    %181 = vdwg.mxu0
    %v182 = vmax.f32 %v142, 0.0
    %v183 = vmax.f32 %v171, 0.0
    %v184 = vmax.f32 %v145, 0.0
    %v185 = vmax.f32 %v174, 0.0
    %v186 = vmax.f32 %v148, 0.0
    %v187 = vmax.f32 %v177, 0.0
    %v188 = vmax.f32 %v151, 0.0
    %v189 = vmax.f32 %v180, 0.0
    %v190 = vld [vmem:[#allocation8] sm:$0xff]
    %v191 = vld [vmem:[#allocation8 + $0x8] sm:$0xff]
    %v192 = vld [vmem:[#allocation8 + $0x10] sm:$0xff]
    %v193 = vld [vmem:[#allocation8 + $0x18] sm:$0xff]
    %v194 = vld [vmem:[#allocation8 + $0x20] sm:$0xff]
    %v195 = vld [vmem:[#allocation8 + $0x28] sm:$0xff]
    %v196 = vld [vmem:[#allocation8 + $0x30] sm:$0xff]
    %v197 = vld [vmem:[#allocation8 + $0x38] sm:$0xff]
    %v198 = vld [vmem:[#allocation8 + $0x40] sm:$0xff]
    %v199 = vld [vmem:[#allocation8 + $0x48] sm:$0xff]
    %v200 = vld [vmem:[#allocation8 + $0x50] sm:$0xff]
    %v201 = vld [vmem:[#allocation8 + $0x58] sm:$0xff]
    %v202 = vld [vmem:[#allocation8 + $0x60] sm:$0xff]
    %v203 = vld [vmem:[#allocation8 + $0x68] sm:$0xff]
    %v204 = vld [vmem:[#allocation8 + $0x70] sm:$0xff]
    %v205 = vld [vmem:[#allocation8 + $0x78] sm:$0xff]
    %v206 = vld [vmem:[#allocation8 + $0x80] sm:$0xff]
    %v207 = vld [vmem:[#allocation8 + $0x88] sm:$0xff]
    %v208 = vld [vmem:[#allocation8 + $0x90] sm:$0xff]
    %v209 = vld [vmem:[#allocation8 + $0x98] sm:$0xff]
    %v210 = vld [vmem:[#allocation8 + $0xa0] sm:$0xff]
    %v211 = vld [vmem:[#allocation8 + $0xa8] sm:$0xff]
    %v212 = vld [vmem:[#allocation8 + $0xb0] sm:$0xff]
    %v213 = vld [vmem:[#allocation8 + $0xb8] sm:$0xff]
    %v214 = vld [vmem:[#allocation8 + $0xc0] sm:$0xff]
    %v215 = vld [vmem:[#allocation8 + $0xc8] sm:$0xff]
    %v216 = vld [vmem:[#allocation8 + $0xd0] sm:$0xff]
    %v217 = vld [vmem:[#allocation8 + $0xd8] sm:$0xff]
    %v218 = vld [vmem:[#allocation8 + $0xe0] sm:$0xff]
    %v219 = vld [vmem:[#allocation8 + $0xe8] sm:$0xff]
    %v220 = vld [vmem:[#allocation8 + $0xf0] sm:$0xff]
    %v221 = vld [vmem:[#allocation8 + $0xf8] sm:$0xff]
    %v222 = vld [vmem:[%s4] sm:$0x1]
    %v224 = vperm.slane %v222, 0
    %226 = vmatpush.msra.mxu0 %v205
    %227 = vmatpush.msra.mxu0 %v204
    %228 = vmatpush.msra.mxu0 %v203
    %229 = vmatpush.msra.mxu0 %v202
    %230 = vmatpush.msra.mxu0 %v201
    %231 = vmatpush.msra.mxu0 %v200
    %232 = vmatpush.msra.mxu0 %v199
    %233 = vmatpush.msra.mxu0 %v198
    %234 = vmatpush.msra.mxu0 %v197
    %235 = vmatpush.msra.mxu0 %v196
    %236 = vmatpush.msra.mxu0 %v195
    %237 = vmatpush.msra.mxu0 %v194
    %238 = vmatpush.msra.mxu0 %v193
    %239 = vmatpush.msra.mxu0 %v192
    %240 = vmatpush.msra.mxu0 %v191
    %241 = vmatpush.msra.mxu0 %v190
    %242 = vmatmul.f32.gmra.mxu0 %v182
    %v243 = vpop.f32.mrf.mxu0
    %v244 = vadd.f32 %v224, %v243
    %245 = vmatmul.f32.gmra.mxu0 %v184
    %v246 = vpop.f32.mrf.mxu0
    %v247 = vadd.f32 %v224, %v246
    %248 = vmatmul.f32.gmra.mxu0 %v186
    %v249 = vpop.f32.mrf.mxu0
    %v250 = vadd.f32 %v224, %v249
    %251 = vmatmul.f32.gmra.mxu0 %v188
    %v252 = vpop.f32.mrf.mxu0
    %v253 = vadd.f32 %v224, %v252
    %254 = vdwg.mxu0
    %255 = vmatpush.msra.mxu0 %v221
    %256 = vmatpush.msra.mxu0 %v220
    %257 = vmatpush.msra.mxu0 %v219
    %258 = vmatpush.msra.mxu0 %v218
    %259 = vmatpush.msra.mxu0 %v217
    %260 = vmatpush.msra.mxu0 %v216
    %261 = vmatpush.msra.mxu0 %v215
    %262 = vmatpush.msra.mxu0 %v214
    %263 = vmatpush.msra.mxu0 %v213
    %264 = vmatpush.msra.mxu0 %v212
    %265 = vmatpush.msra.mxu0 %v211
    %266 = vmatpush.msra.mxu0 %v210
    %267 = vmatpush.msra.mxu0 %v209
    %268 = vmatpush.msra.mxu0 %v208
    %269 = vmatpush.msra.mxu0 %v207
    %270 = vmatpush.msra.mxu0 %v206
    %271 = vmatmul.f32.gmra.mxu0 %v183
    %v272 = vpop.f32.mrf.mxu0
    %v273 = vadd.f32 %v244, %v272
    %274 = vmatmul.f32.gmra.mxu0 %v185
    %v275 = vpop.f32.mrf.mxu0
    %v276 = vadd.f32 %v247, %v275
    %277 = vmatmul.f32.gmra.mxu0 %v187
    %v278 = vpop.f32.mrf.mxu0
    %v279 = vadd.f32 %v250, %v278
    %280 = vmatmul.f32.gmra.mxu0 %v189
    %v281 = vpop.f32.mrf.mxu0
    %v282 = vadd.f32 %v253, %v281
    %283 = vdwg.mxu0
    %284 = vst [vmem:[#allocation10] sm:$0xff] %v273
    %285 = vst [vmem:[#allocation10 + $0x8] sm:$0xff] %v276
    %286 = vst [vmem:[#allocation10 + $0x10] sm:$0xff] %v279
    %287 = vst [vmem:[#allocation10 + $0x18] sm:$0xff] %v282
    // Predicated region
    $region38: #{tpu_custom_call.1} parent=1 // pred_check
      _
    $region39: #{tpu_custom_call.1} parent=1 // pred_check_branch
      %289 = sbr.rel (0) target = $region41
    $region40: #{tpu_custom_call.1} parent=1 // pred_region
      %291 = vsyncadd [#allocation4], 0
      %s292 = sshll.u32 [#allocation10], 4
      %s293 = int_to_ptr.vmem [resolvable:$true] %s292
      %s294 = sshll.u32 %s5, 4
      %s295 = int_to_ptr.hbm [resolvable:$true] %s294
      %300 = dma.vmem_to_hbm [thread:$0]  %s293, 512, %s295, [#allocation4], 128, 128, 8
    $region41: #{tpu_custom_call.1} parent=1 // pred_fallthru
      _
    // Predicated region
    $region42: #{tpu_custom_call.1} parent=1 // pred_check
      _
    $region43: #{tpu_custom_call.1} parent=1 // pred_check_branch
      %302 = sbr.rel (0) target = $region45
    $region44: #{tpu_custom_call.1} parent=1 // pred_region
      %304 = dma.done [#allocation4], 512
    $region45: #{tpu_custom_call.1} parent=1 // pred_fallthru
      _
    %305 = vsyncpa [#allocation3], 1
    %306 = vsyncpa [#allocation6], 1
    %307 = vsyncpa [#allocation9], 1
    %308 = vsyncpa [#allocation4], 1

</llo_original>
